<compile_context>
chip_gen: v7x
topology: tpu7x:2x2x1
jax: 0.10.0
libtpu: 0.0.40
codegen_flags: <defaults>
</compile_context>

<pallas_src>
import jax
import jax.numpy as jnp
from jax.experimental import pallas as pl
from jax.experimental.pallas import tpu as pltpu


def _ljpm_kernel(x_ref, w_ref, b_ref, o_ref):
    # x: [TB, H] (f32 or bf16); W: [H, N_pad] bf16 (resident); b: [1, N_pad] f32.
    x = x_ref[...]
    if x.dtype != jnp.bfloat16:
        x = x.astype(jnp.bfloat16)                     # VPU cast, MXU-native input
    acc = jnp.dot(x, w_ref[...], preferred_element_type=jnp.float32)
    o_ref[...] = acc + b_ref[...]                      # f32 bias add, f32 output


def prepare_ljpm_params(w_art, b_art, w_acc, b_acc, lane_pad=128):
    """One-time parameter prep (call at load time, OUTSIDE the jitted forward).

    w_*: PyTorch nn.Linear layout [out_features, in_features]; b_*: [out_features].
    Returns fused weight [H, N_pad] (bf16), fused bias [1, N_pad] (f32), and the
    real per-head output sizes.
    """
    art_out = w_art.shape[0]
    acc_out = w_acc.shape[0]
    n_real = art_out + acc_out
    n_pad = max(lane_pad, ((n_real + lane_pad - 1) // lane_pad) * lane_pad)

    w = jnp.concatenate([w_art, w_acc], axis=0)                  # [n_real, H]
    w = jnp.pad(w, ((0, n_pad - n_real), (0, 0)))                # [n_pad, H]
    w_fused = w.T.astype(jnp.bfloat16)                           # [H, n_pad] bf16

    b = jnp.concatenate([b_art, b_acc], axis=0)                  # [n_real]
    b_fused = jnp.pad(b, (0, n_pad - n_real)).reshape(1, n_pad).astype(jnp.float32)
    return w_fused, b_fused, art_out, acc_out


def ljpm_predictor(tensors, w_fused, b_fused, art_out, acc_out, *, batch_tile=512):
    """tensors: [B, H]; w_fused: [H, N_pad] bf16; b_fused: [1, N_pad] f32."""
    batch, hidden = tensors.shape
    n_pad = w_fused.shape[1]

    # Whole batch when small (block == full dim is always legal); 512-row,
    # 8-aligned tiles for serving-sized batches.  Ragged last tiles are handled
    # by BlockSpec (padded reads / masked final writes).
    tb = batch if batch <= batch_tile else batch_tile
    grid = (pl.cdiv(batch, tb),)

    cost = pl.CostEstimate(
        flops=2 * batch * hidden * n_pad,
        transcendentals=0,
        bytes_accessed=(tensors.size * tensors.dtype.itemsize
                        + w_fused.size * 2            # bf16 weights
                        + b_fused.size * 4
                        + batch * n_pad * 4),         # f32 output
    )

    out = pl.pallas_call(
        _ljpm_kernel,
        out_shape=jax.ShapeDtypeStruct((batch, n_pad), jnp.float32),
        grid_spec=pltpu.PrefetchScalarGridSpec(
            num_scalar_prefetch=0,
            grid=grid,
            in_specs=[
                pl.BlockSpec((tb, hidden), lambda i: (i, 0)),      # x tile (pipelined)
                pl.BlockSpec((hidden, n_pad), lambda i: (0, 0)),   # fused W (resident)
                pl.BlockSpec((1, n_pad), lambda i: (0, 0)),        # fused bias (resident)
            ],
            out_specs=pl.BlockSpec((tb, n_pad), lambda i: (i, 0)),
        ),
        compiler_params=pltpu.CompilerParams(
            dimension_semantics=("parallel",),
            vmem_limit_bytes=64 << 20,
        ),
        cost_estimate=cost,
    )(tensors, w_fused, b_fused)

    # Split the fused lane-dense output and apply view(batch, -1, 2) in glue
    # (cheap slices / metadata-only reshapes).
    articles = out[:, :art_out].reshape(batch, -1, 2)
    accusations = out[:, art_out:art_out + acc_out].reshape(batch, -1, 2)
    return {"article": articles, "accusation": accusations}


if __name__ == "__main__":
    # Small shapes consistent with the module.
    batch = 2
    hidden_size = 32
    articles_number = 5
    accusations_number = 6

    key = jax.random.PRNGKey(0)
    k_x, k_wa, k_ba, k_wc, k_bc = jax.random.split(key, 5)

    x = jax.random.normal(k_x, (batch, hidden_size), dtype=jnp.float32)
    # PyTorch nn.Linear weight layout: [out_features, in_features]
    w_art = jax.random.normal(k_wa, (articles_number * 2, hidden_size), jnp.float32) * 0.1
    b_art = jax.random.normal(k_ba, (articles_number * 2,), jnp.float32) * 0.1
    w_acc = jax.random.normal(k_wc, (accusations_number * 2, hidden_size), jnp.float32) * 0.1
    b_acc = jax.random.normal(k_bc, (accusations_number * 2,), jnp.float32) * 0.1

    # One-time parameter preparation (outside the hot forward path).
    w_fused, b_fused, art_out, acc_out = prepare_ljpm_params(w_art, b_art, w_acc, b_acc)

    out = ljpm_predictor(x, w_fused, b_fused, art_out, acc_out)
    jax.block_until_ready(out)

    # References.
    ref_art_f32 = (x @ w_art.T + b_art).reshape(batch, -1, 2)
    ref_acc_f32 = (x @ w_acc.T + b_acc).reshape(batch, -1, 2)
    # bf16-exact reference (what the kernel computes: bf16 matmul, f32 accum + bias).
    xb = x.astype(jnp.bfloat16).astype(jnp.float32)
    wab = w_art.astype(jnp.bfloat16).astype(jnp.float32)
    wcb = w_acc.astype(jnp.bfloat16).astype(jnp.float32)
    ref_art_bf16 = (xb @ wab.T + b_art).reshape(batch, -1, 2)
    ref_acc_bf16 = (xb @ wcb.T + b_acc).reshape(batch, -1, 2)

    assert out["article"].shape == (batch, articles_number, 2)
    assert out["accusation"].shape == (batch, accusations_number, 2)
    assert jnp.allclose(out["article"], ref_art_bf16, atol=1e-4, rtol=1e-4)
    assert jnp.allclose(out["accusation"], ref_acc_bf16, atol=1e-4, rtol=1e-4)
    # Sanity vs. the pure-f32 PyTorch semantics (bf16 rounding tolerance).
    assert jnp.allclose(out["article"], ref_art_f32, atol=2e-2, rtol=2e-2)
    assert jnp.allclose(out["accusation"], ref_acc_f32, atol=2e-2, rtol=2e-2)

    print("KERNEL_OK")
</pallas_src>

<mosaic_0001>
module attributes {stable_mosaic.version = 11 : i64} {
  func.func @_ljpm_kernel(%arg0: i32, %arg1: memref<2x32xf32, #tpu.memory_space<vmem>>, %arg2: memref<32x128xbf16, #tpu.memory_space<vmem>>, %arg3: memref<1x128xf32, #tpu.memory_space<vmem>>, %arg4: memref<2x128xf32, #tpu.memory_space<vmem>>) attributes {dimension_semantics = [#tpu.dimension_semantics<parallel>], iteration_bounds = array<i64: 1>, scalar_prefetch = 0 : i64, scratch_operands = 0 : i64, tpu.core_type = #tpu.core_type<tc>, window_params = [{transform_indices = @transform_0, window_bounds = array<i64: 2, 32>}, {pipeline_mode = #tpu.pipeline_mode<synchronous>, transform_indices = @transform_1, window_bounds = array<i64: 32, 128>}, {pipeline_mode = #tpu.pipeline_mode<synchronous>, transform_indices = @transform_2, window_bounds = array<i64: 1, 128>}, {transform_indices = @transform_3, window_bounds = array<i64: 2, 128>}]} {
    %c0 = arith.constant 0 : index
    %c0_0 = arith.constant 0 : index
    %0 = vector.load %arg1[%c0, %c0_0] : memref<2x32xf32, #tpu.memory_space<vmem>>, vector<2x32xf32>
    %1 = arith.truncf %0 : vector<2x32xf32> to vector<2x32xbf16>
    %c0_1 = arith.constant 0 : index
    %c0_2 = arith.constant 0 : index
    %2 = vector.load %arg2[%c0_1, %c0_2] : memref<32x128xbf16, #tpu.memory_space<vmem>>, vector<32x128xbf16>
    %cst = arith.constant dense<0.000000e+00> : vector<2x128xf32>
    %3 = tpu.matmul %1, %2, %cst {dimension_numbers = #tpu.dot_dimension_numbers<[1], [0], [0], [1], [0, 0, 1, 1], [], []>} : vector<2x32xbf16>, vector<32x128xbf16>, vector<2x128xf32> -> vector<2x128xf32>
    %c0_3 = arith.constant 0 : index
    %c0_4 = arith.constant 0 : index
    %4 = vector.load %arg3[%c0_3, %c0_4] : memref<1x128xf32, #tpu.memory_space<vmem>>, vector<1x128xf32>
    %5 = vector.broadcast %4 : vector<1x128xf32> to vector<2x128xf32>
    %6 = arith.addf %3, %5 : vector<2x128xf32>
    %c0_5 = arith.constant 0 : index
    %c0_6 = arith.constant 0 : index
    %7 = vector.load %arg4[%c0_5, %c0_6] : memref<2x128xf32, #tpu.memory_space<vmem>>, vector<2x128xf32>
    tpu.vector_store %arg4[%c0_5, %c0_6], %6 {strides = array<i32>} : memref<2x128xf32, #tpu.memory_space<vmem>>, vector<2x128xf32>,
    return
  }
  func.func @transform_0(%arg0: i32) -> (i32, i32) {
    %c0_i32 = arith.constant 0 : i32
    %c0_i32_0 = arith.constant 0 : i32
    return %arg0, %c0_i32 : i32, i32
  }
  func.func @transform_1(%arg0: i32) -> (i32, i32) {
    %c0_i32 = arith.constant 0 : i32
    %c0_i32_0 = arith.constant 0 : i32
    %c0_i32_1 = arith.constant 0 : i32
    return %c0_i32, %c0_i32_0 : i32, i32
  }
  func.func @transform_2(%arg0: i32) -> (i32, i32) {
    %c0_i32 = arith.constant 0 : i32
    %c0_i32_0 = arith.constant 0 : i32
    %c0_i32_1 = arith.constant 0 : i32
    return %c0_i32, %c0_i32_0 : i32, i32
  }
  func.func @transform_3(%arg0: i32) -> (i32, i32) {
    %c0_i32 = arith.constant 0 : i32
    %c0_i32_0 = arith.constant 0 : i32
    return %arg0, %c0_i32 : i32, i32
  }
}

</mosaic_0001>

<llo_original>
// kernel: tpu_custom_call.1
$region0: #{tpu_custom_call.1}
  #allocation0 [shape = 'u32[]', space=smem, size = 0x4, offset = 0x4, fixed_abs, tag = 'smem constant byte address 0x4 - core index']
  #allocation1 [shape = 'u32[144,128]{1,0:T(1,128)}', space=vmem, size = 0x12000, scoped, tag = 'internal scratch']
  %s0 = inlined_call_operand.hbm [shape: f32[2,32], index: 0, kind: input, shape index: {}]
  %s1 = inlined_call_operand.hbm [shape: bf16[32,128], index: 1, kind: input, shape index: {}]
  %s2 = inlined_call_operand.hbm [shape: f32[1,128], index: 2, kind: input, shape index: {}]
  %s3 = inlined_call_operand.hbm [shape: f32[2,128], index: 3, kind: output, shape index: {}]
  %s4 = sld [smem:[#allocation0]]
  $region34: #{tpu_custom_call.1} parent=0
    _
  %s6 = ssub.s32 1, %s4
  %s7 = scalar_select 0, %s6, %s4
  $region1: #{tpu_custom_call.1} parent=0
    #allocation2 [shape = 'u8[1024]{0}', space=vmem, size = 0x400, scoped, tag = 'input window, operand 0, single buffered']
    #allocation3 [shape = 's32[1]{0}', space=sflag, size = 0x4, scoped, tag = 'scoped memory for tpu_custom_call.1']
    #allocation4 [shape = 's32[1]{0}', space=sflag, size = 0x4, scoped, tag = 'scoped memory for tpu_custom_call.1']
    #allocation5 [shape = 'u8[8192]{0}', space=vmem, size = 0x2000, scoped, tag = 'input window, operand 1, single buffered']
    #allocation6 [shape = 's32[1]{0}', space=sflag, size = 0x4, scoped, tag = 'scoped memory for tpu_custom_call.1']
    #allocation7 [shape = 'u8[512]{0}', space=vmem, size = 0x400, scoped, tag = 'input window, operand 2, single buffered']
    #allocation8 [shape = 'u8[1024]{0}', space=vmem, size = 0x400, scoped, tag = 'output window, operand 0, single buffered']
    %8 = vsyncpa [#allocation3], 0
    %9 = vsyncpa [#allocation6], 0
    %10 = vsyncpa [#allocation4], 0
    // Predicated region
    $region2: #{tpu_custom_call.1} parent=1 // pred_check
      _
    $region3: #{tpu_custom_call.1} parent=1 // pred_check_branch
      %12 = sbr.rel (0) target = $region5
    $region4: #{tpu_custom_call.1} parent=1 // pred_region
      %s14 = ssub.s32 32, 32
      %15 = vsyncadd [#allocation3], %s14
      %s17 = sshll.u32 [#allocation2], 4
      %s18 = int_to_ptr.vmem [resolvable:$true] %s17
      %20 = dma.hbm_to_vmem [thread:$0]  %s0, 32, %s18, [#allocation3]
    $region5: #{tpu_custom_call.1} parent=1 // pred_fallthru
      _
    // Predicated region
    $region6: #{tpu_custom_call.1} parent=1 // pred_check
      _
    $region7: #{tpu_custom_call.1} parent=1 // pred_check_branch
      %22 = sbr.rel (0) target = $region9
    $region8: #{tpu_custom_call.1} parent=1 // pred_region
      %s24 = ssub.s32 256, 256
      %25 = vsyncadd [#allocation6], %s24
      %s26 = sshll.u32 [#allocation5], 4
      %s27 = int_to_ptr.vmem [resolvable:$true] %s26
      %32 = dma.hbm_to_vmem [thread:$0]  %s1, 256, %s27, [#allocation6], 64, 64, 4
    $region9: #{tpu_custom_call.1} parent=1 // pred_fallthru
      _
    // Predicated region
    $region10: #{tpu_custom_call.1} parent=1 // pred_check
      _
    $region11: #{tpu_custom_call.1} parent=1 // pred_check_branch
      %34 = sbr.rel (0) target = $region13
    $region12: #{tpu_custom_call.1} parent=1 // pred_region
      %s36 = ssub.s32 16, 16
      %37 = vsyncadd [#allocation6], %s36
      %s39 = sshll.u32 [#allocation7], 4
      %s40 = int_to_ptr.vmem [resolvable:$true] %s39
      %42 = dma.hbm_to_vmem [thread:$0]  %s2, 16, %s40, [#allocation6]
    $region13: #{tpu_custom_call.1} parent=1 // pred_fallthru
      _
    // Predicated region
    $region14: #{tpu_custom_call.1} parent=1 // pred_check
      _
    $region15: #{tpu_custom_call.1} parent=1 // pred_check_branch
      %44 = sbr.rel (0) target = $region17
    $region16: #{tpu_custom_call.1} parent=1 // pred_region
      %45 = dma.done [#allocation3], 32
    $region17: #{tpu_custom_call.1} parent=1 // pred_fallthru
      _
    // Predicated region
    $region18: #{tpu_custom_call.1} parent=1 // pred_check
      _
    $region19: #{tpu_custom_call.1} parent=1 // pred_check_branch
      %47 = sbr.rel (0) target = $region21
    $region20: #{tpu_custom_call.1} parent=1 // pred_region
      %48 = dma.done [#allocation6], 256
    $region21: #{tpu_custom_call.1} parent=1 // pred_fallthru
      _
    // Predicated region
    $region22: #{tpu_custom_call.1} parent=1 // pred_check
      _
    $region23: #{tpu_custom_call.1} parent=1 // pred_check_branch
      %50 = sbr.rel (0) target = $region25
    $region24: #{tpu_custom_call.1} parent=1 // pred_region
      %51 = dma.done [#allocation6], 16
    $region25: #{tpu_custom_call.1} parent=1 // pred_fallthru
      _
    %v53 = vld [vmem:[#allocation2] sm:$0x3]
    %v54 = vpack.c.bf16 %v53, %v53
    %v55 = vld [vmem:[#allocation5] sm:$0xf]
    %v56 = vld [vmem:[#allocation5 + $0x4] sm:$0xf]
    %v57 = vld [vmem:[#allocation5 + $0x8] sm:$0xf]
    %v58 = vld [vmem:[#allocation5 + $0xc] sm:$0xf]
    %v59 = vld [vmem:[#allocation7] sm:$0x1]
    %v61 = vlaneseq
    %v62 = vshrl.u32 %v61, 7
    %v63 = vsub.s32 0, %v62
    %v64 = vrot.slane %v59, %v63
    %v70 = vunpack.c.l.b16 %v55
    %v71 = vunpack.c.l.b16 %v56
    %v72 = vunpack.c.l.b16 %v57
    %v73 = vunpack.c.l.b16 %v58
    %v74 = vpack.c.b16 %v71, %v70
    %v75 = vpack.c.b16 %v73, %v72
    %vm78 = vcmask 261120
    %v80 = vsel %vm78, %v54, 0
    %82 = vmatprep.subr.bf16.mxu0 0
    %83 = vmatpush1.bf16.msra.mxu0 %v74
    %84 = vmatprep.subr.bf16.mxu0 0
    %85 = vmatpush1.bf16.msra.mxu0 %v75
    %86 = vmatprep.subr.bf16.mxu0 0
    %87 = vmatpush1.bf16.msra.mxu0 0
    %88 = vmatprep.subr.bf16.mxu0 0
    %89 = vmatpush1.bf16.msra.mxu0 0
    %90 = vmatprep.subr.bf16.mxu0 0
    %91 = vmatpush1.bf16.msra.mxu0 0
    %92 = vmatprep.subr.bf16.mxu0 0
    %93 = vmatpush1.bf16.msra.mxu0 0
    %94 = vmatprep.subr.bf16.mxu0 0
    %95 = vmatpush1.bf16.msra.mxu0 0
    %96 = vmatprep.subr.bf16.mxu0 0
    %97 = vmatpush1.bf16.msra.mxu0 0
    %98 = vmatprep.subr.bf16.mxu0 0
    %99 = vmatpush1.bf16.msra.mxu0 0
    %100 = vmatprep.subr.bf16.mxu0 0
    %101 = vmatpush1.bf16.msra.mxu0 0
    %102 = vmatprep.subr.bf16.mxu0 0
    %103 = vmatpush1.bf16.msra.mxu0 0
    %104 = vmatprep.subr.bf16.mxu0 0
    %105 = vmatpush1.bf16.msra.mxu0 0
    %106 = vmatprep.subr.bf16.mxu0 0
    %107 = vmatpush1.bf16.msra.mxu0 0
    %108 = vmatprep.subr.bf16.mxu0 0
    %109 = vmatpush1.bf16.msra.mxu0 0
    %110 = vmatprep.subr.bf16.mxu0 0
    %111 = vmatpush1.bf16.msra.mxu0 0
    %112 = vmatprep.subr.bf16.mxu0 0
    %113 = vmatpush1.bf16.msra.mxu0 0
    %114 = vmatprep.mubr.bf16.mxu0 0
    %115 = vmatmul.mubr.bf16.gmra.mrb[0].mxu0 %v80
    %v116 = vpop.f32.mrb[0].mxu0
    %v117 = vadd.f32 %v64, %v116
    %v118 = vpop.f32.mrb[0].mxu0
    %v119 = vpop.f32.mrb[0].mxu0
    %v120 = vpop.f32.mrb[0].mxu0
    %121 = vdwg.mxu0
    %122 = vst [vmem:[#allocation8] sm:$0x3] %v117
    // Predicated region
    $region26: #{tpu_custom_call.1} parent=1 // pred_check
      _
    $region27: #{tpu_custom_call.1} parent=1 // pred_check_branch
      %124 = sbr.rel (0) target = $region29
    $region28: #{tpu_custom_call.1} parent=1 // pred_region
      %s126 = ssub.s32 32, 32
      %127 = vsyncadd [#allocation4], %s126
      %s129 = sshll.u32 [#allocation8], 4
      %s130 = int_to_ptr.vmem [resolvable:$true] %s129
      %132 = dma.vmem_to_hbm [thread:$0]  %s130, 32, %s3, [#allocation4]
    $region29: #{tpu_custom_call.1} parent=1 // pred_fallthru
      _
    // Predicated region
    $region30: #{tpu_custom_call.1} parent=1 // pred_check
      _
    $region31: #{tpu_custom_call.1} parent=1 // pred_check_branch
      %134 = sbr.rel (0) target = $region33
    $region32: #{tpu_custom_call.1} parent=1 // pred_region
      %135 = dma.done [#allocation4], 32
    $region33: #{tpu_custom_call.1} parent=1 // pred_fallthru
      _
    %136 = vsyncpa [#allocation3], 1
    %137 = vsyncpa [#allocation6], 1
    %138 = vsyncpa [#allocation4], 1

</llo_original>
